<compile_context>
chip_gen: v6e
topology: v6e:2x2x1
jax: 0.10.0
libtpu: 0.0.40
codegen_flags: <defaults>
</compile_context>

<pallas_src>
import functools

import jax
import jax.numpy as jnp
from jax.experimental import pallas as pl
from jax.experimental.pallas import tpu as pltpu

LANES = 128                       # vreg lane width
SUB = 16                          # sublane rows per slab (bf16-safe multiple)
SLAB = SUB * LANES                # 2048 elements per slab
TARGET_BLOCK_BYTES = 4 * 1024 * 1024   # per-operand bytes per grid step
NUM_SPLITS = 2                    # leading "parallel" axis (v7x: one per TC)
VMEM_LIMIT_BYTES = 40 * 1024 * 1024    # covers 2 ops x 2 bufs x 4 MiB + slack


def _dice_kernel(x_ref, t_ref, part_ref, *,
                 n_valid_slabs, block_slabs, blocks_per_split, has_padding):
    """Grid: (split c, block-within-split i); block = (block_slabs, SUB, LANES).

    part_ref (VMEM output block, shape (1, 3, SUB, LANES), resident across i)
    carries lane-parallel partial sums for this split:
      part[0] = sum(h * t)   with h = tanh(0.5 * x)
      part[1] = sum(h)
      part[2] = sum(t)
    The sigmoid affine correction (sigmoid = 0.5*h + 0.5) is applied once in
    the wrapper's finalize.
    """
    c = pl.program_id(0)
    i = pl.program_id(1)

    @pl.when(i == 0)
    def _():
        part_ref[...] = jnp.zeros_like(part_ref)

    x = x_ref[...].astype(jnp.float32)
    t = t_ref[...].astype(jnp.float32)

    # Single EUP op per element; no per-element affine ops.
    h = jnp.tanh(0.5 * x)

    def _accumulate(hv, tv):
        # Sum over the leading (slab) axis: pure VPU vreg adds, no XLU.
        part_ref[0, 0] += jnp.sum(hv * tv, axis=0)
        part_ref[0, 1] += jnp.sum(hv, axis=0)
        part_ref[0, 2] += jnp.sum(tv, axis=0)

    if has_padding:
        # Static Python branch: only emitted when a partial / out-of-range
        # block can exist.  The masked path is gated behind pl.when so the
        # extra iota/compare/select VPU ops run only on boundary blocks.
        b = c * blocks_per_split + i
        is_partial = (b + 1) * block_slabs > n_valid_slabs

        @pl.when(is_partial)
        def _():
            slab_ids = b * block_slabs + jax.lax.broadcasted_iota(
                jnp.int32, x.shape, 0)
            mask = slab_ids < n_valid_slabs
            _accumulate(jnp.where(mask, h, 0.0), jnp.where(mask, t, 0.0))

        @pl.when(jnp.logical_not(is_partial))
        def _():
            _accumulate(h, t)
    else:
        _accumulate(h, t)


def dice_loss(inputs, targets, smooth=1e-6, block_slabs=None):
    """Returns (dice, 1 - dice) exactly like DiceLoss.forward."""
    x = inputs.reshape(-1)
    t = targets.reshape(-1)
    n = x.shape[0]

    n_slabs = n // SLAB
    bulk = n_slabs * SLAB

    # Ragged tail (< SLAB elements): reduced with plain jnp and folded into
    # the finalize.  Zero cost when n % SLAB == 0.
    if bulk < n:
        xt = x[bulk:].astype(jnp.float32)
        tt = t[bulk:].astype(jnp.float32)
        st = jax.nn.sigmoid(xt)
        tail_inter = jnp.sum(st * tt)
        tail_s = jnp.sum(st)
        tail_t = jnp.sum(tt)
    else:
        tail_inter = jnp.float32(0.0)
        tail_s = jnp.float32(0.0)
        tail_t = jnp.float32(0.0)

    if n_slabs == 0:
        # Tiny input: nothing for the kernel to do.
        dice = (2.0 * tail_inter + smooth) / (tail_s + tail_t + smooth)
        return dice, 1.0 - dice

    # Free, layout-preserving view of the bulk as lane-dense slabs.
    x3 = x[:bulk].reshape(n_slabs, SUB, LANES)
    t3 = t[:bulk].reshape(n_slabs, SUB, LANES)

    if block_slabs is None:
        # Dtype-aware block size: fixed byte footprint per grid step.
        itemsize = max(int(x.dtype.itemsize), int(t.dtype.itemsize))
        block_slabs = max(1, TARGET_BLOCK_BYTES // (SLAB * itemsize))
    block_slabs = min(int(block_slabs), n_slabs)

    num_blocks = pl.cdiv(n_slabs, block_slabs)
    num_splits = NUM_SPLITS if num_blocks >= 2 else 1
    blocks_per_split = pl.cdiv(num_blocks, num_splits)
    # True if any grid step can see slabs past n_slabs (partial last block
    # and/or an out-of-range block created by the 2-way split).
    has_padding = num_splits * blocks_per_split * block_slabs > n_slabs

    if num_splits * blocks_per_split == num_blocks:
        in_idx = lambda c, i: (c * blocks_per_split + i, 0, 0)
    else:
        # Clamp out-of-range block indices (the split over-covers by at most
        # one block); the kernel masks their contribution to zero anyway.
        in_idx = lambda c, i: (
            jnp.minimum(c * blocks_per_split + i, num_blocks - 1), 0, 0)

    kernel = functools.partial(
        _dice_kernel,
        n_valid_slabs=n_slabs,
        block_slabs=block_slabs,
        blocks_per_split=blocks_per_split,
        has_padding=has_padding,
    )

    cost = pl.CostEstimate(
        flops=5 * n,
        transcendentals=n,
        bytes_accessed=(int(x.dtype.itemsize) + int(t.dtype.itemsize)) * n
        + num_splits * 3 * SUB * LANES * 4,
    )

    partials = pl.pallas_call(
        kernel,
        out_shape=jax.ShapeDtypeStruct((num_splits, 3, SUB, LANES),
                                       jnp.float32),
        grid_spec=pltpu.PrefetchScalarGridSpec(
            num_scalar_prefetch=0,
            grid=(num_splits, blocks_per_split),
            in_specs=[
                pl.BlockSpec((block_slabs, SUB, LANES), in_idx),
                pl.BlockSpec((block_slabs, SUB, LANES), in_idx),
            ],
            # Output block depends only on the split index -> resident
            # accumulator across the reduction axis, disjoint across cores.
            out_specs=pl.BlockSpec((1, 3, SUB, LANES),
                                   lambda c, i: (c, 0, 0, 0)),
        ),
        compiler_params=pltpu.CompilerParams(
            dimension_semantics=("parallel", "arbitrary"),
            vmem_limit_bytes=VMEM_LIMIT_BYTES,
        ),
        cost_estimate=cost,
    )(x3, t3)

    # Finalize: combine per-split lane-parallel partials, apply the sigmoid
    # affine correction once, add the ragged tail, and divide.
    sums = jnp.sum(partials, axis=(0, 2, 3))          # (3,) : [sum(h*t), sum(h), sum(t)]
    ht_sum, h_sum, t_bulk = sums[0], sums[1], sums[2]
    inter = 0.5 * (ht_sum + t_bulk) + tail_inter       # sum(sigmoid(x) * t)
    s_sum = 0.5 * (h_sum + float(bulk)) + tail_s       # sum(sigmoid(x))
    t_sum = t_bulk + tail_t                            # sum(t)

    dice = (2.0 * inter + smooth) / (s_sum + t_sum + smooth)
    return dice, 1.0 - dice


def _reference_dice_loss(inputs, targets, smooth=1e-6):
    s = jax.nn.sigmoid(inputs.reshape(-1).astype(jnp.float32))
    t = targets.reshape(-1).astype(jnp.float32)
    inter = jnp.sum(s * t)
    dice = (2.0 * inter + smooth) / (jnp.sum(s) + jnp.sum(t) + smooth)
    return dice, 1.0 - dice


def _check(name, inputs, targets, **kwargs):
    dice, loss = dice_loss(inputs, targets, **kwargs)
    dice = jax.block_until_ready(dice)
    loss = jax.block_until_ready(loss)
    ref_dice, ref_loss = _reference_dice_loss(inputs, targets)
    assert jnp.allclose(dice, ref_dice, atol=1e-5, rtol=1e-5), (
        name, dice, ref_dice)
    assert jnp.allclose(loss, ref_loss, atol=1e-5, rtol=1e-5), (
        name, loss, ref_loss)


if __name__ == "__main__":
    key = jax.random.PRNGKey(0)
    k1, k2, k3, k4, k5, k6 = jax.random.split(key, 6)

    # Case 1: NCHW like the PyTorch module (2,4,16,16); numel == 2048 == SLAB.
    inputs1 = jax.random.normal(k1, (2, 4, 16, 16), dtype=jnp.float32)
    targets1 = (jax.random.uniform(k2, (2, 4, 16, 16)) > 0.5).astype(jnp.float32)
    _check("case1", inputs1, targets1)

    # Case 2: ragged tail (numel = 3200, not a multiple of 2048).
    inputs2 = jax.random.normal(k3, (2, 4, 20, 20), dtype=jnp.float32)
    targets2 = (jax.random.uniform(k4, (2, 4, 20, 20)) > 0.5).astype(jnp.float32)
    _check("case2", inputs2, targets2)

    # Case 3: exercises the 2-way core split, the pl.when-gated partial-block
    # mask, the clamped out-of-range block, and a ragged tail:
    # numel = 10496 -> 5 slabs + 256-element tail; block_slabs=2 -> 3 blocks
    # over a (2, 2) grid.
    inputs3 = jax.random.normal(k5, (2, 4, 32, 41), dtype=jnp.float32)
    targets3 = (jax.random.uniform(k6, (2, 4, 32, 41)) > 0.5).astype(jnp.float32)
    _check("case3", inputs3, targets3, block_slabs=2)

    print("KERNEL_OK")
</pallas_src>

<mosaic_0001>
module attributes {stable_mosaic.version = 11 : i64} {
  func.func @_dice_kernel(%arg0: i32, %arg1: i32, %arg2: memref<1x16x128xf32, #tpu.memory_space<vmem>>, %arg3: memref<1x16x128xf32, #tpu.memory_space<vmem>>, %arg4: memref<1x3x16x128xf32, #tpu.memory_space<vmem>>) attributes {dimension_semantics = [#tpu.dimension_semantics<parallel>, #tpu.dimension_semantics<arbitrary>], iteration_bounds = array<i64: 1, 1>, scalar_prefetch = 0 : i64, scratch_operands = 0 : i64, tpu.core_type = #tpu.core_type<tc>, window_params = [{transform_indices = @transform_0, window_bounds = array<i64: 1, 16, 128>}, {transform_indices = @transform_1, window_bounds = array<i64: 1, 16, 128>}, {transform_indices = @transform_2, window_bounds = array<i64: 1, 3, 16, 128>}]} {
    %c0_i32 = arith.constant 0 : i32
    %0 = arith.cmpi eq, %arg1, %c0_i32 : i32
    %1 = arith.extui %0 : i1 to i32
    %c0_i32_0 = arith.constant 0 : i32
    %2 = arith.cmpi ne, %1, %c0_i32_0 : i32
    scf.if %2 {
      %cst_31 = arith.constant 0.000000e+00 : f32
      %30 = vector.broadcast %cst_31 : f32 to vector<1x3x16x128xf32>
      %c0_32 = arith.constant 0 : index
      %c0_33 = arith.constant 0 : index
      %c0_34 = arith.constant 0 : index
      %c0_35 = arith.constant 0 : index
      %31 = vector.load %arg4[%c0_32, %c0_33, %c0_34, %c0_35] : memref<1x3x16x128xf32, #tpu.memory_space<vmem>>, vector<1x3x16x128xf32>
      tpu.vector_store %arg4[%c0_32, %c0_33, %c0_34, %c0_35], %30 {strides = array<i32>} : memref<1x3x16x128xf32, #tpu.memory_space<vmem>>, vector<1x3x16x128xf32>,
    } else {
    }
    %c0 = arith.constant 0 : index
    %c0_1 = arith.constant 0 : index
    %c0_2 = arith.constant 0 : index
    %3 = vector.load %arg2[%c0, %c0_1, %c0_2] : memref<1x16x128xf32, #tpu.memory_space<vmem>>, vector<1x16x128xf32>
    %c0_3 = arith.constant 0 : index
    %c0_4 = arith.constant 0 : index
    %c0_5 = arith.constant 0 : index
    %4 = vector.load %arg3[%c0_3, %c0_4, %c0_5] : memref<1x16x128xf32, #tpu.memory_space<vmem>>, vector<1x16x128xf32>
    %cst = arith.constant 5.000000e-01 : f32
    %5 = vector.broadcast %cst : f32 to vector<1x16x128xf32>
    %6 = arith.mulf %5, %3 : vector<1x16x128xf32>
    %7 = math.tanh %6 : vector<1x16x128xf32>
    %c0_6 = arith.constant 0 : index
    %c0_7 = arith.constant 0 : index
    %c0_8 = arith.constant 0 : index
    %c0_9 = arith.constant 0 : index
    %8 = vector.load %arg4[%c0_6, %c0_7, %c0_8, %c0_9] : memref<1x3x16x128xf32, #tpu.memory_space<vmem>>, vector<1x1x16x128xf32>
    %9 = vector.shape_cast %8 : vector<1x1x16x128xf32> to vector<16x128xf32>
    %10 = arith.mulf %7, %4 : vector<1x16x128xf32>
    %cst_10 = arith.constant dense<0.000000e+00> : vector<16x128xf32>
    %11 = vector.multi_reduction <add>, %10, %cst_10 [0] : vector<1x16x128xf32> to vector<16x128xf32>
    %12 = arith.addf %9, %11 : vector<16x128xf32>
    %c0_11 = arith.constant 0 : index
    %c0_12 = arith.constant 0 : index
    %c0_13 = arith.constant 0 : index
    %c0_14 = arith.constant 0 : index
    %13 = vector.load %arg4[%c0_11, %c0_12, %c0_13, %c0_14] : memref<1x3x16x128xf32, #tpu.memory_space<vmem>>, vector<1x1x16x128xf32>
    %14 = vector.shape_cast %13 : vector<1x1x16x128xf32> to vector<16x128xf32>
    %15 = vector.shape_cast %12 : vector<16x128xf32> to vector<1x1x16x128xf32>
    tpu.vector_store %arg4[%c0_11, %c0_12, %c0_13, %c0_14], %15 {strides = array<i32>} : memref<1x3x16x128xf32, #tpu.memory_space<vmem>>, vector<1x1x16x128xf32>,
    %c0_15 = arith.constant 0 : index
    %c1 = arith.constant 1 : index
    %c0_16 = arith.constant 0 : index
    %c0_17 = arith.constant 0 : index
    %16 = vector.load %arg4[%c0_15, %c1, %c0_16, %c0_17] : memref<1x3x16x128xf32, #tpu.memory_space<vmem>>, vector<1x1x16x128xf32>
    %17 = vector.shape_cast %16 : vector<1x1x16x128xf32> to vector<16x128xf32>
    %cst_18 = arith.constant dense<0.000000e+00> : vector<16x128xf32>
    %18 = vector.multi_reduction <add>, %7, %cst_18 [0] : vector<1x16x128xf32> to vector<16x128xf32>
    %19 = arith.addf %17, %18 : vector<16x128xf32>
    %c0_19 = arith.constant 0 : index
    %c1_20 = arith.constant 1 : index
    %c0_21 = arith.constant 0 : index
    %c0_22 = arith.constant 0 : index
    %20 = vector.load %arg4[%c0_19, %c1_20, %c0_21, %c0_22] : memref<1x3x16x128xf32, #tpu.memory_space<vmem>>, vector<1x1x16x128xf32>
    %21 = vector.shape_cast %20 : vector<1x1x16x128xf32> to vector<16x128xf32>
    %22 = vector.shape_cast %19 : vector<16x128xf32> to vector<1x1x16x128xf32>
    tpu.vector_store %arg4[%c0_19, %c1_20, %c0_21, %c0_22], %22 {strides = array<i32>} : memref<1x3x16x128xf32, #tpu.memory_space<vmem>>, vector<1x1x16x128xf32>,
    %c0_23 = arith.constant 0 : index
    %c2 = arith.constant 2 : index
    %c0_24 = arith.constant 0 : index
    %c0_25 = arith.constant 0 : index
    %23 = vector.load %arg4[%c0_23, %c2, %c0_24, %c0_25] : memref<1x3x16x128xf32, #tpu.memory_space<vmem>>, vector<1x1x16x128xf32>
    %24 = vector.shape_cast %23 : vector<1x1x16x128xf32> to vector<16x128xf32>
    %cst_26 = arith.constant dense<0.000000e+00> : vector<16x128xf32>
    %25 = vector.multi_reduction <add>, %4, %cst_26 [0] : vector<1x16x128xf32> to vector<16x128xf32>
    %26 = arith.addf %24, %25 : vector<16x128xf32>
    %c0_27 = arith.constant 0 : index
    %c2_28 = arith.constant 2 : index
    %c0_29 = arith.constant 0 : index
    %c0_30 = arith.constant 0 : index
    %27 = vector.load %arg4[%c0_27, %c2_28, %c0_29, %c0_30] : memref<1x3x16x128xf32, #tpu.memory_space<vmem>>, vector<1x1x16x128xf32>
    %28 = vector.shape_cast %27 : vector<1x1x16x128xf32> to vector<16x128xf32>
    %29 = vector.shape_cast %26 : vector<16x128xf32> to vector<1x1x16x128xf32>
    tpu.vector_store %arg4[%c0_27, %c2_28, %c0_29, %c0_30], %29 {strides = array<i32>} : memref<1x3x16x128xf32, #tpu.memory_space<vmem>>, vector<1x1x16x128xf32>,
    return
  }
  func.func @transform_0(%arg0: i32, %arg1: i32) -> (i32, i32, i32) {
    %c1_i32 = arith.constant 1 : i32
    %0 = arith.muli %arg0, %c1_i32 : i32
    %1 = arith.addi %0, %arg1 : i32
    %c0_i32 = arith.constant 0 : i32
    %c0_i32_0 = arith.constant 0 : i32
    %c0_i32_1 = arith.constant 0 : i32
    return %1, %c0_i32, %c0_i32_0 : i32, i32, i32
  }
  func.func @transform_1(%arg0: i32, %arg1: i32) -> (i32, i32, i32) {
    %c1_i32 = arith.constant 1 : i32
    %0 = arith.muli %arg0, %c1_i32 : i32
    %1 = arith.addi %0, %arg1 : i32
    %c0_i32 = arith.constant 0 : i32
    %c0_i32_0 = arith.constant 0 : i32
    %c0_i32_1 = arith.constant 0 : i32
    return %1, %c0_i32, %c0_i32_0 : i32, i32, i32
  }
  func.func @transform_2(%arg0: i32, %arg1: i32) -> (i32, i32, i32, i32) {
    %c0_i32 = arith.constant 0 : i32
    %c0_i32_0 = arith.constant 0 : i32
    %c0_i32_1 = arith.constant 0 : i32
    %c0_i32_2 = arith.constant 0 : i32
    return %arg0, %c0_i32, %c0_i32_0, %c0_i32_1 : i32, i32, i32, i32
  }
}

</mosaic_0001>

<llo_original>
// kernel: tpu_custom_call.1
$region0: #{tpu_custom_call.1}
  #allocation0 [shape = 'u32[]', space=smem, size = 0x4, offset = 0x4, fixed_abs, tag = 'smem constant byte address 0x4 - core index']
  #allocation1 [shape = 'u32[144,128]{1,0:T(1,128)}', space=vmem, size = 0x12000, scoped, tag = 'internal scratch']
  %s0 = inlined_call_operand.hbm [shape: f32[1,16,128], index: 0, kind: input, shape index: {}]
  %s1 = inlined_call_operand.hbm [shape: f32[1,16,128], index: 1, kind: input, shape index: {}]
  %s2 = inlined_call_operand.hbm [shape: f32[1,3,16,128], index: 2, kind: output, shape index: {}]
  %s3 = sld [smem:[#allocation0]]
  $region30: #{tpu_custom_call.1} parent=0
    _
  %s5 = ssub.s32 1, %s3
  %s6 = scalar_select 0, %s5, %s3
  $region1: #{tpu_custom_call.1} parent=0
    #allocation2 [shape = 'u8[8192]{0}', space=vmem, size = 0x2000, scoped, tag = 'input window, operand 0, single buffered']
    #allocation3 [shape = 's32[1]{0}', space=sflag, size = 0x4, scoped, tag = 'scoped memory for tpu_custom_call.1']
    #allocation4 [shape = 's32[1]{0}', space=sflag, size = 0x4, scoped, tag = 'scoped memory for tpu_custom_call.1']
    #allocation5 [shape = 'u8[8192]{0}', space=vmem, size = 0x2000, scoped, tag = 'input window, operand 1, single buffered']
    #allocation6 [shape = 's32[1]{0}', space=sflag, size = 0x4, scoped, tag = 'scoped memory for tpu_custom_call.1']
    #allocation7 [shape = 'u8[24576]{0}', space=vmem, size = 0x6000, scoped, tag = 'output window, operand 0, single buffered']
    %7 = vsyncpa [#allocation3], 0
    %8 = vsyncpa [#allocation6], 0
    %9 = vsyncpa [#allocation4], 0
    // Predicated region
    $region2: #{tpu_custom_call.1} parent=1 // pred_check
      _
    $region3: #{tpu_custom_call.1} parent=1 // pred_check_branch
      %11 = sbr.rel (0) target = $region5
    $region4: #{tpu_custom_call.1} parent=1 // pred_region
      %s12 = sadd.s32 0, 0
      %s14 = ssub.s32 256, 256
      %15 = vsyncadd [#allocation3], %s14
      %s16 = smul.addr %s12, 2
      %s17 = smul.addr %s16, 128
      %s18 = scalar_lea.hbm %s0, %s17
      %s19 = sshll.u32 [#allocation2], 4
      %s20 = int_to_ptr.vmem [resolvable:$true] %s19
      %25 = dma.hbm_to_vmem [thread:$0]  %s18, 256, %s20, [#allocation3], 128, 128, 8
    $region5: #{tpu_custom_call.1} parent=1 // pred_fallthru
      _
    // Predicated region
    $region6: #{tpu_custom_call.1} parent=1 // pred_check
      _
    $region7: #{tpu_custom_call.1} parent=1 // pred_check_branch
      %27 = sbr.rel (0) target = $region9
    $region8: #{tpu_custom_call.1} parent=1 // pred_region
      %s28 = sadd.s32 0, 0
      %s30 = ssub.s32 256, 256
      %31 = vsyncadd [#allocation6], %s30
      %s32 = smul.addr %s28, 2
      %s33 = smul.addr %s32, 128
      %s34 = scalar_lea.hbm %s1, %s33
      %s35 = sshll.u32 [#allocation5], 4
      %s36 = int_to_ptr.vmem [resolvable:$true] %s35
      %41 = dma.hbm_to_vmem [thread:$0]  %s34, 256, %s36, [#allocation6], 128, 128, 8
    $region9: #{tpu_custom_call.1} parent=1 // pred_fallthru
      _
    // Predicated region
    $region10: #{tpu_custom_call.1} parent=1 // pred_check
      _
    $region11: #{tpu_custom_call.1} parent=1 // pred_check_branch
      %43 = sbr.rel (0) target = $region13
    $region12: #{tpu_custom_call.1} parent=1 // pred_region
      %44 = dma.done [#allocation3], 256
    $region13: #{tpu_custom_call.1} parent=1 // pred_fallthru
      _
    // Predicated region
    $region14: #{tpu_custom_call.1} parent=1 // pred_check
      _
    $region15: #{tpu_custom_call.1} parent=1 // pred_check_branch
      %46 = sbr.rel (0) target = $region17
    $region16: #{tpu_custom_call.1} parent=1 // pred_region
      %47 = dma.done [#allocation6], 256
    $region17: #{tpu_custom_call.1} parent=1 // pred_fallthru
      _
    %s48 = sadd.s32 0, 0
    %s49 = sadd.s32 0, 0
    %p50 = scmp.eq.s32.totalorder 0, 0
    // Predicated region
    $region18: #{tpu_custom_call.1} parent=1 // pred_check
      %p51 = pneg %p50
    $region19: #{tpu_custom_call.1} parent=1 // pred_check_branch
      %53 = sbr.rel (%p51) target = $region21
    $region20: #{tpu_custom_call.1} parent=1 // pred_region
      %54 = vst [vmem:[#allocation7] sm:$0xff] 0.0
      %55 = vst [vmem:[#allocation7 + $0x8] sm:$0xff] 0.0
      %56 = vst [vmem:[#allocation7 + $0x10] sm:$0xff] 0.0
      %57 = vst [vmem:[#allocation7 + $0x18] sm:$0xff] 0.0
      %58 = vst [vmem:[#allocation7 + $0x20] sm:$0xff] 0.0
      %59 = vst [vmem:[#allocation7 + $0x28] sm:$0xff] 0.0
    $region21: #{tpu_custom_call.1} parent=1 // pred_fallthru
      _
    %v60 = vld [vmem:[#allocation2] sm:$0xff]
    %v61 = vld [vmem:[#allocation2 + $0x8] sm:$0xff]
    %v62 = vld [vmem:[#allocation5] sm:$0xff]
    %v63 = vld [vmem:[#allocation5 + $0x8] sm:$0xff]
    %v64 = vmul.f32 %v60, 0.5
    %v65 = vmul.f32 %v61, 0.5
    %v66 = vtanh.pop %v64
    %v67 = vtanh.pop %v65
    %v68 = vld [vmem:[#allocation7] sm:$0xff]
    %v69 = vld [vmem:[#allocation7 + $0x8] sm:$0xff]
    %v70 = vmul.f32 %v66, %v62
    %v71 = vmul.f32 %v67, %v63
    %v72 = vadd.f32 %v70, 0.0
    %v73 = vadd.f32 %v71, 0.0
    %v74 = vadd.f32 %v68, %v72
    %v75 = vadd.f32 %v69, %v73
    %76 = vst [vmem:[#allocation7] sm:$0xff] %v74
    %77 = vst [vmem:[#allocation7 + $0x8] sm:$0xff] %v75
    %s78 = scalar_lea.vmem [#allocation7], 16
    %v79 = vld [vmem:[%s78] sm:$0xff]
    %v80 = vld [vmem:[%s78 + $0x8] sm:$0xff]
    %v81 = vadd.f32 %v66, 0.0
    %v82 = vadd.f32 %v67, 0.0
    %v83 = vadd.f32 %v79, %v81
    %v84 = vadd.f32 %v80, %v82
    %85 = vst [vmem:[%s78] sm:$0xff] %v83
    %86 = vst [vmem:[%s78 + $0x8] sm:$0xff] %v84
    %s87 = scalar_lea.vmem [#allocation7], 32
    %v88 = vld [vmem:[%s87] sm:$0xff]
    %v89 = vld [vmem:[%s87 + $0x8] sm:$0xff]
    %v90 = vadd.f32 %v62, 0.0
    %v91 = vadd.f32 %v63, 0.0
    %v92 = vadd.f32 %v88, %v90
    %v93 = vadd.f32 %v89, %v91
    %94 = vst [vmem:[%s87] sm:$0xff] %v92
    %95 = vst [vmem:[%s87 + $0x8] sm:$0xff] %v93
    // Predicated region
    $region22: #{tpu_custom_call.1} parent=1 // pred_check
      _
    $region23: #{tpu_custom_call.1} parent=1 // pred_check_branch
      %97 = sbr.rel (0) target = $region25
    $region24: #{tpu_custom_call.1} parent=1 // pred_region
      %s99 = ssub.s32 768, 768
      %100 = vsyncadd [#allocation4], %s99
      %s101 = sshll.u32 [#allocation7], 4
      %s102 = int_to_ptr.vmem [resolvable:$true] %s101
      %107 = dma.vmem_to_hbm [thread:$0]  %s102, 768, %s2, [#allocation4], 128, 128, 8
    $region25: #{tpu_custom_call.1} parent=1 // pred_fallthru
      _
    // Predicated region
    $region26: #{tpu_custom_call.1} parent=1 // pred_check
      _
    $region27: #{tpu_custom_call.1} parent=1 // pred_check_branch
      %109 = sbr.rel (0) target = $region29
    $region28: #{tpu_custom_call.1} parent=1 // pred_region
      %110 = dma.done [#allocation4], 768
    $region29: #{tpu_custom_call.1} parent=1 // pred_fallthru
      _
    %111 = vsyncpa [#allocation3], 1
    %112 = vsyncpa [#allocation6], 1
    %113 = vsyncpa [#allocation4], 1

</llo_original>
